<compile_context>
chip_gen: v5e
topology: v5e:2x2
jax: 0.10.0
libtpu: 0.0.40
codegen_flags: <defaults>
</compile_context>

<pallas_src>
import jax
import jax.numpy as jnp
from jax.experimental import pallas as pl
from jax.experimental.pallas import tpu as pltpu


def _pse_head_kernel(x_ref, w_ref, b_ref, text_ref, kern_ref):
    """One (batch, spatial-tile) grid step.

    x_ref:    (1, C_in, T)       VMEM, spatial axis lane-dense
    w_ref:    (C_out, C_in)      VMEM, grid-invariant (resident)
    b_ref:    (C_out, 1)         VMEM, grid-invariant (resident)
    text_ref: (1, 1, T)          VMEM out (channel 0)
    kern_ref: (1, C_out - 1, T)  VMEM out (channels 1..)
    """
    x = x_ref[0].astype(jnp.float32)        # (C_in, T)
    w = w_ref[...].astype(jnp.float32)      # (C_out, C_in)
    b = b_ref[...].astype(jnp.float32)      # (C_out, 1)
    c_in = x.shape[0]

    # Split weights/bias once (tiny, vreg-resident) so each output map is
    # accumulated directly in its own store shape.
    wt, wk = w[0:1, :], w[1:, :]            # (1, C_in), (C_out-1, C_in)
    bt, bk = b[0:1, :], b[1:, :]            # (1, 1),    (C_out-1, 1)

    # Unrolled channel contraction as VPU broadcast-FMAs; each x row is loaded
    # once and feeds both accumulators.
    xr = x[0:1, :]                          # (1, T)
    acc_t = wt[:, 0:1] * xr                 # (1, T)
    acc_k = wk[:, 0:1] * xr                 # (C_out-1, T)
    for ci in range(1, c_in):
        xr = x[ci:ci + 1, :]
        acc_t = acc_t + wt[:, ci:ci + 1] * xr
        acc_k = acc_k + wk[:, ci:ci + 1] * xr

    text_ref[0] = jax.nn.sigmoid(acc_t + bt).astype(text_ref.dtype)
    kern_ref[0] = jax.nn.sigmoid(acc_k + bk).astype(kern_ref.dtype)


def pse_head_forward(x_nchw, weight, bias, name=("text", "kernels"),
                     tile_hw=32768):
    """PseHead.forward: binarize(feature), then split channel 0 vs channels 1:.

    x_nchw: (N, C_in, H, W)
    weight: (C_out, C_in) or (C_out, C_in, 1, 1)  -- 1x1 conv weight
    bias:   (C_out,)
    """
    N, C_in, H, W = x_nchw.shape
    if weight.ndim == 4:                       # Conv2d layout (C_out, C_in, 1, 1)
        weight = weight.reshape(weight.shape[0], weight.shape[1])
    C_out = weight.shape[0]
    assert weight.shape[1] == C_in
    assert C_out >= 2, "PSE head needs >= 2 output maps (text + kernels)"
    HW = H * W

    # Free reshape (collapses trailing dims only): NCHW -> (N, C_in, HW).
    x = x_nchw.reshape(N, C_in, HW)
    w = weight.astype(jnp.float32)                   # (C_out, C_in)
    b = bias.astype(jnp.float32).reshape(C_out, 1)   # (C_out, 1)

    # Spatial tile: multiple of 128 lanes (or the padded full extent for small
    # maps).  Non-dividing tails are handled by Pallas partial-block masking.
    hw_padded = ((HW + 127) // 128) * 128
    t = min(int(tile_hw), hw_padded)
    grid = (N, pl.cdiv(HW, t))

    text_flat, kern_flat = pl.pallas_call(
        _pse_head_kernel,
        out_shape=(
            jax.ShapeDtypeStruct((N, 1, HW), x_nchw.dtype),
            jax.ShapeDtypeStruct((N, C_out - 1, HW), x_nchw.dtype),
        ),
        grid_spec=pltpu.PrefetchScalarGridSpec(
            num_scalar_prefetch=0,
            grid=grid,
            in_specs=[
                pl.BlockSpec((1, C_in, t), lambda n, j: (n, 0, j)),
                pl.BlockSpec((C_out, C_in), lambda n, j: (0, 0)),
                pl.BlockSpec((C_out, 1), lambda n, j: (0, 0)),
            ],
            out_specs=[
                pl.BlockSpec((1, 1, t), lambda n, j: (n, 0, j)),
                pl.BlockSpec((1, C_out - 1, t), lambda n, j: (n, 0, j)),
            ],
        ),
        compiler_params=pltpu.CompilerParams(
            dimension_semantics=("parallel", "parallel")),
    )(x, w, b)

    # Trailing-dim reshapes back to NCHW; no transposes, no slicing copies.
    return {
        name[0]: text_flat.reshape(N, 1, H, W),
        name[1]: kern_flat.reshape(N, C_out - 1, H, W),
    }


if __name__ == "__main__":
    # Small shapes consistent with the module: NCHW feature map.
    N, C_in, H, W = 2, 4, 16, 16
    C_out = 7  # typical PSE: 1 text map + 6 shrink-kernel maps

    key = jax.random.PRNGKey(0)
    kx, kw, kb = jax.random.split(key, 3)
    x = jax.random.normal(kx, (N, C_in, H, W), dtype=jnp.float32)
    # Conv2d-layout weight (C_out, C_in, 1, 1), as the PyTorch module stores it.
    weight = jax.random.normal(kw, (C_out, C_in, 1, 1), dtype=jnp.float32) * 0.1
    bias = jax.random.normal(kb, (C_out,), dtype=jnp.float32) * 0.1

    out = pse_head_forward(x, weight, bias, name=("text", "kernels"))
    jax.block_until_ready(out)

    assert out["text"].shape == (N, 1, H, W)
    assert out["kernels"].shape == (N, C_out - 1, H, W)

    # Cross-check against a plain-JAX reference of the same forward.
    w2d = weight.reshape(C_out, C_in)
    ref = jax.nn.sigmoid(
        jnp.einsum("nchw,oc->nohw", x, w2d) + bias[None, :, None, None])
    assert jnp.allclose(out["text"], ref[:, 0:1], atol=1e-5)
    assert jnp.allclose(out["kernels"], ref[:, 1:], atol=1e-5)

    print("KERNEL_OK")
</pallas_src>

<mosaic_0001>
module attributes {stable_mosaic.version = 11 : i64} {
  func.func @_pse_head_kernel(%arg0: i32, %arg1: i32, %arg2: memref<1x4x256xf32, #tpu.memory_space<vmem>>, %arg3: memref<7x4xf32, #tpu.memory_space<vmem>>, %arg4: memref<7x1xf32, #tpu.memory_space<vmem>>, %arg5: memref<1x1x256xf32, #tpu.memory_space<vmem>>, %arg6: memref<1x6x256xf32, #tpu.memory_space<vmem>>) attributes {dimension_semantics = [#tpu.dimension_semantics<parallel>, #tpu.dimension_semantics<parallel>], iteration_bounds = array<i64: 2, 1>, scalar_prefetch = 0 : i64, scratch_operands = 0 : i64, tpu.core_type = #tpu.core_type<tc>, window_params = [{transform_indices = @transform_0, window_bounds = array<i64: 1, 4, 256>}, {pipeline_mode = #tpu.pipeline_mode<synchronous>, transform_indices = @transform_1, window_bounds = array<i64: 7, 4>}, {pipeline_mode = #tpu.pipeline_mode<synchronous>, transform_indices = @transform_2, window_bounds = array<i64: 7, 1>}, {transform_indices = @transform_3, window_bounds = array<i64: 1, 1, 256>}, {transform_indices = @transform_4, window_bounds = array<i64: 1, 6, 256>}]} {
    %c0 = arith.constant 0 : index
    %c0_0 = arith.constant 0 : index
    %c0_1 = arith.constant 0 : index
    %0 = vector.load %arg2[%c0, %c0_0, %c0_1] : memref<1x4x256xf32, #tpu.memory_space<vmem>>, vector<1x4x256xf32>
    %1 = vector.shape_cast %0 : vector<1x4x256xf32> to vector<4x256xf32>
    %c0_2 = arith.constant 0 : index
    %c0_3 = arith.constant 0 : index
    %2 = vector.load %arg3[%c0_2, %c0_3] : memref<7x4xf32, #tpu.memory_space<vmem>>, vector<7x4xf32>
    %c0_4 = arith.constant 0 : index
    %c0_5 = arith.constant 0 : index
    %3 = vector.load %arg4[%c0_4, %c0_5] : memref<7x1xf32, #tpu.memory_space<vmem>>, vector<7x1xf32>
    %4 = vector.extract_strided_slice %2 {offsets = [0, 0], sizes = [1, 4], strides = [1, 1]} : vector<7x4xf32> to vector<1x4xf32>
    %5 = vector.extract_strided_slice %2 {offsets = [1, 0], sizes = [6, 4], strides = [1, 1]} : vector<7x4xf32> to vector<6x4xf32>
    %6 = vector.extract_strided_slice %3 {offsets = [0, 0], sizes = [1, 1], strides = [1, 1]} : vector<7x1xf32> to vector<1x1xf32>
    %7 = vector.extract_strided_slice %3 {offsets = [1, 0], sizes = [6, 1], strides = [1, 1]} : vector<7x1xf32> to vector<6x1xf32>
    %8 = vector.extract_strided_slice %1 {offsets = [0, 0], sizes = [1, 256], strides = [1, 1]} : vector<4x256xf32> to vector<1x256xf32>
    %9 = vector.extract_strided_slice %4 {offsets = [0, 0], sizes = [1, 1], strides = [1, 1]} : vector<1x4xf32> to vector<1x1xf32>
    %10 = vector.broadcast %9 : vector<1x1xf32> to vector<1x256xf32>
    %11 = arith.mulf %10, %8 : vector<1x256xf32>
    %12 = vector.extract_strided_slice %5 {offsets = [0, 0], sizes = [6, 1], strides = [1, 1]} : vector<6x4xf32> to vector<6x1xf32>
    %13 = vector.broadcast %12 : vector<6x1xf32> to vector<6x256xf32>
    %14 = vector.broadcast %8 : vector<1x256xf32> to vector<6x256xf32>
    %15 = arith.mulf %13, %14 : vector<6x256xf32>
    %16 = vector.extract_strided_slice %1 {offsets = [1, 0], sizes = [1, 256], strides = [1, 1]} : vector<4x256xf32> to vector<1x256xf32>
    %17 = vector.extract_strided_slice %4 {offsets = [0, 1], sizes = [1, 1], strides = [1, 1]} : vector<1x4xf32> to vector<1x1xf32>
    %18 = vector.broadcast %17 : vector<1x1xf32> to vector<1x256xf32>
    %19 = arith.mulf %18, %16 : vector<1x256xf32>
    %20 = arith.addf %11, %19 : vector<1x256xf32>
    %21 = vector.extract_strided_slice %5 {offsets = [0, 1], sizes = [6, 1], strides = [1, 1]} : vector<6x4xf32> to vector<6x1xf32>
    %22 = vector.broadcast %21 : vector<6x1xf32> to vector<6x256xf32>
    %23 = vector.broadcast %16 : vector<1x256xf32> to vector<6x256xf32>
    %24 = arith.mulf %22, %23 : vector<6x256xf32>
    %25 = arith.addf %15, %24 : vector<6x256xf32>
    %26 = vector.extract_strided_slice %1 {offsets = [2, 0], sizes = [1, 256], strides = [1, 1]} : vector<4x256xf32> to vector<1x256xf32>
    %27 = vector.extract_strided_slice %4 {offsets = [0, 2], sizes = [1, 1], strides = [1, 1]} : vector<1x4xf32> to vector<1x1xf32>
    %28 = vector.broadcast %27 : vector<1x1xf32> to vector<1x256xf32>
    %29 = arith.mulf %28, %26 : vector<1x256xf32>
    %30 = arith.addf %20, %29 : vector<1x256xf32>
    %31 = vector.extract_strided_slice %5 {offsets = [0, 2], sizes = [6, 1], strides = [1, 1]} : vector<6x4xf32> to vector<6x1xf32>
    %32 = vector.broadcast %31 : vector<6x1xf32> to vector<6x256xf32>
    %33 = vector.broadcast %26 : vector<1x256xf32> to vector<6x256xf32>
    %34 = arith.mulf %32, %33 : vector<6x256xf32>
    %35 = arith.addf %25, %34 : vector<6x256xf32>
    %36 = vector.extract_strided_slice %1 {offsets = [3, 0], sizes = [1, 256], strides = [1, 1]} : vector<4x256xf32> to vector<1x256xf32>
    %37 = vector.extract_strided_slice %4 {offsets = [0, 3], sizes = [1, 1], strides = [1, 1]} : vector<1x4xf32> to vector<1x1xf32>
    %38 = vector.broadcast %37 : vector<1x1xf32> to vector<1x256xf32>
    %39 = arith.mulf %38, %36 : vector<1x256xf32>
    %40 = arith.addf %30, %39 : vector<1x256xf32>
    %41 = vector.extract_strided_slice %5 {offsets = [0, 3], sizes = [6, 1], strides = [1, 1]} : vector<6x4xf32> to vector<6x1xf32>
    %42 = vector.broadcast %41 : vector<6x1xf32> to vector<6x256xf32>
    %43 = vector.broadcast %36 : vector<1x256xf32> to vector<6x256xf32>
    %44 = arith.mulf %42, %43 : vector<6x256xf32>
    %45 = arith.addf %35, %44 : vector<6x256xf32>
    %46 = vector.broadcast %6 : vector<1x1xf32> to vector<1x256xf32>
    %47 = arith.addf %40, %46 : vector<1x256xf32>
    %48 = arith.negf %47 : vector<1x256xf32>
    %49 = math.exp %48 : vector<1x256xf32>
    %cst = arith.constant 1.000000e+00 : f32
    %50 = vector.broadcast %cst : f32 to vector<1x256xf32>
    %51 = arith.addf %50, %49 : vector<1x256xf32>
    %52 = arith.divf %50, %51 : vector<1x256xf32>
    %c0_6 = arith.constant 0 : index
    %c0_7 = arith.constant 0 : index
    %c0_8 = arith.constant 0 : index
    %53 = vector.load %arg5[%c0_6, %c0_7, %c0_8] : memref<1x1x256xf32, #tpu.memory_space<vmem>>, vector<1x1x256xf32>
    %54 = vector.shape_cast %53 : vector<1x1x256xf32> to vector<1x256xf32>
    %55 = vector.shape_cast %52 : vector<1x256xf32> to vector<1x1x256xf32>
    tpu.vector_store %arg5[%c0_6, %c0_7, %c0_8], %55 {strides = array<i32>} : memref<1x1x256xf32, #tpu.memory_space<vmem>>, vector<1x1x256xf32>,
    %56 = vector.broadcast %7 : vector<6x1xf32> to vector<6x256xf32>
    %57 = arith.addf %45, %56 : vector<6x256xf32>
    %58 = arith.negf %57 : vector<6x256xf32>
    %59 = math.exp %58 : vector<6x256xf32>
    %cst_9 = arith.constant 1.000000e+00 : f32
    %60 = vector.broadcast %cst_9 : f32 to vector<6x256xf32>
    %61 = arith.addf %60, %59 : vector<6x256xf32>
    %62 = arith.divf %60, %61 : vector<6x256xf32>
    %c0_10 = arith.constant 0 : index
    %c0_11 = arith.constant 0 : index
    %c0_12 = arith.constant 0 : index
    %63 = vector.load %arg6[%c0_10, %c0_11, %c0_12] : memref<1x6x256xf32, #tpu.memory_space<vmem>>, vector<1x6x256xf32>
    %64 = vector.shape_cast %63 : vector<1x6x256xf32> to vector<6x256xf32>
    %65 = vector.shape_cast %62 : vector<6x256xf32> to vector<1x6x256xf32>
    tpu.vector_store %arg6[%c0_10, %c0_11, %c0_12], %65 {strides = array<i32>} : memref<1x6x256xf32, #tpu.memory_space<vmem>>, vector<1x6x256xf32>,
    return
  }
  func.func @transform_0(%arg0: i32, %arg1: i32) -> (i32, i32, i32) {
    %c0_i32 = arith.constant 0 : i32
    %c0_i32_0 = arith.constant 0 : i32
    return %arg0, %c0_i32, %arg1 : i32, i32, i32
  }
  func.func @transform_1(%arg0: i32, %arg1: i32) -> (i32, i32) {
    %c0_i32 = arith.constant 0 : i32
    %c0_i32_0 = arith.constant 0 : i32
    %c0_i32_1 = arith.constant 0 : i32
    return %c0_i32, %c0_i32_0 : i32, i32
  }
  func.func @transform_2(%arg0: i32, %arg1: i32) -> (i32, i32) {
    %c0_i32 = arith.constant 0 : i32
    %c0_i32_0 = arith.constant 0 : i32
    %c0_i32_1 = arith.constant 0 : i32
    return %c0_i32, %c0_i32_0 : i32, i32
  }
  func.func @transform_3(%arg0: i32, %arg1: i32) -> (i32, i32, i32) {
    %c0_i32 = arith.constant 0 : i32
    %c0_i32_0 = arith.constant 0 : i32
    return %arg0, %c0_i32, %arg1 : i32, i32, i32
  }
  func.func @transform_4(%arg0: i32, %arg1: i32) -> (i32, i32, i32) {
    %c0_i32 = arith.constant 0 : i32
    %c0_i32_0 = arith.constant 0 : i32
    return %arg0, %c0_i32, %arg1 : i32, i32, i32
  }
}

</mosaic_0001>

<llo_original>
// kernel: tpu_custom_call.1
$region0: #{tpu_custom_call.1}
  #allocation0 [shape = 'u32[]', space=smem, size = 0x4, offset = 0x4, fixed_abs, tag = 'smem constant byte address 0x4 - core index']
  #allocation1 [shape = 'u32[72,128]{1,0:T(1,128)}', space=vmem, size = 0x9000, scoped, tag = 'internal scratch']
  %s0 = inlined_call_operand.vmem [shape: f32[2,4,256], index: 0, kind: input, shape index: {}]
  %s1 = inlined_call_operand.vmem [shape: f32[7,4], index: 1, kind: input, shape index: {}]
  %s2 = inlined_call_operand.vmem [shape: f32[7,1], index: 2, kind: input, shape index: {}]
  %s3 = inlined_call_operand.hbm [shape: f32[2,1,256], index: 3, kind: output, shape index: {0}]
  %s4 = inlined_call_operand.vmem [shape: f32[2,6,256], index: 4, kind: output, shape index: {1}]
  %5 = xla_tuple %s3, %s4
  %s6 = sld [smem:[#allocation0]]
  $region53: #{tpu_custom_call.1} parent=0
    _
  %s8 = ssub.s32 1, %s6
  %s9 = scalar_select 0, %s8, %s6
  $region1: #{tpu_custom_call.1} parent=0
    #allocation2 [shape = 'u8[2048]{0}', space=vmem, size = 0x800, scoped, tag = 'output window, operand 0']
    #allocation3 [shape = 's32[2]{0}', space=sflag, size = 0x8, scoped, tag = 'scoped memory for tpu_custom_call.1']
    %10 = vsyncpa [#allocation3], 0
    %s11 = scalar_lea.sflag [#allocation3], 1
    %12 = vsyncpa %s11, 0
    loop: start=0, step=1, limit=4
    $region2: #{tpu_custom_call.1} parent=1 // loop_pre_header
      _
    $region3: #{tpu_custom_call.1} parent=1 // loop_header
      %s14 = sphi 0, %s18
      %p15 = scmp.ge.s32.totalorder %s14, 4
      %s21 = sphi 0, %s33
      %s22 = sphi 0, %s29
      %s23 = sphi 0, %s21
      %s24 = sphi 0, %s22
      %s25 = sphi 0, %s23
      %s26 = sphi 0, %s24
      %s38 = sphi 0, %s40
      %s41 = sphi 0, %s38
      %s42 = sphi 0, %s41
      %s58 = sphi 0, %s42
      %s62 = sphi 0, %s62
      %s64 = sphi 0, %s62
      %s65 = sphi 0, %s64
      %s79 = sphi 0, %s65
      %s83 = sphi 0, %s83
      %s85 = sphi 0, %s83
      %s86 = sphi 0, %s85
      %s100 = sphi 0, %s86
      %s108 = sphi 0, %s110
      %s111 = sphi 0, %s108
      %s112 = sphi 0, %s111
      %s128 = sphi 0, %s112
      %s136 = sphi 0, %s138
      %s139 = sphi 0, %s136
      %s140 = sphi 0, %s139
      %s156 = sphi 0, %s140
    $region4: #{tpu_custom_call.1} parent=1 // loop_header_branch
      %17 = sbr.rel (%p15) target = $region8
    $region5: #{tpu_custom_call.1} parent=1 // loop_body
      %s19 = ssub.s32 %s14, 1
      %s20 = ssub.s32 %s14, 2
      %s27 = sadd.s32 1, %s22
      %p28 = scmp.ge.s32.totalorder %s27, 1
      %s29 = scalar_select %p28, 0, %s27
      %s30 = sadd.s32 1, %s21
      %s31 = scalar_select %p28, %s30, %s21
      %p32 = scmp.ge.s32.totalorder %s31, 2
      %s33 = scalar_select %p32, 0, %s31
      %s34 = ssub.s32 %s21, %s33
      %s35 = ssub.s32 %s22, %s29
      %s36 = sor.u32 %s34, %s35
      %p37 = scmp.eq.s32.totalorder %s36, 0
      %s39 = sadd.s32 %s38, 1
      %s40 = scalar_select %p37, %s38, %s39
      %p43 = pneg %p37
      %p44 = scmp.eq.s32.totalorder %s14, 1
      %p45 = por %p43, %p44
      %p46 = scmp.ne.s32.totalorder %s38, %s41
      %p47 = scmp.eq.s32.totalorder %s14, 0
      %p48 = por %p46, %p47
      %p49 = scmp.ne.s32.totalorder %s38, %s41
      %p50 = scmp.eq.s32.totalorder %s19, 1
      %p51 = por %p49, %p50
      %p52 = scmp.ne.s32.totalorder %s41, %s42
      %p53 = scmp.eq.s32.totalorder %s19, 0
      %p54 = por %p52, %p53
      %p55 = scmp.ne.s32.totalorder %s41, %s42
      %p56 = scmp.eq.s32.totalorder %s20, 1
      %p57 = por %p55, %p56
      %p59 = scmp.ne.s32.totalorder %s42, %s58
      %p60 = scmp.eq.s32.totalorder %s20, 0
      %p61 = por %p59, %p60
      %s63 = sadd.s32 %s62, 1
      %p66 = scmp.eq.s32.totalorder %s14, 1
      %p67 = scmp.ne.s32.totalorder %s62, %s64
      %p68 = scmp.eq.s32.totalorder %s14, 0
      %p69 = por %p67, %p68
      %p70 = scmp.ne.s32.totalorder %s62, %s64
      %p71 = scmp.eq.s32.totalorder %s19, 1
      %p72 = por %p70, %p71
      %p73 = scmp.ne.s32.totalorder %s64, %s65
      %p74 = scmp.eq.s32.totalorder %s19, 0
      %p75 = por %p73, %p74
      %p76 = scmp.ne.s32.totalorder %s64, %s65
      %p77 = scmp.eq.s32.totalorder %s20, 1
      %p78 = por %p76, %p77
      %p80 = scmp.ne.s32.totalorder %s65, %s79
      %p81 = scmp.eq.s32.totalorder %s20, 0
      %p82 = por %p80, %p81
      %s84 = sadd.s32 %s83, 1
      %p87 = scmp.eq.s32.totalorder %s14, 1
      %p88 = scmp.ne.s32.totalorder %s83, %s85
      %p89 = scmp.eq.s32.totalorder %s14, 0
      %p90 = por %p88, %p89
      %p91 = scmp.ne.s32.totalorder %s83, %s85
      %p92 = scmp.eq.s32.totalorder %s19, 1
      %p93 = por %p91, %p92
      %p94 = scmp.ne.s32.totalorder %s85, %s86
      %p95 = scmp.eq.s32.totalorder %s19, 0
      %p96 = por %p94, %p95
      %p97 = scmp.ne.s32.totalorder %s85, %s86
      %p98 = scmp.eq.s32.totalorder %s20, 1
      %p99 = por %p97, %p98
      %p101 = scmp.ne.s32.totalorder %s86, %s100
      %p102 = scmp.eq.s32.totalorder %s20, 0
      %p103 = por %p101, %p102
      %s104 = ssub.s32 %s21, %s33
      %s105 = ssub.s32 %s22, %s29
      %s106 = sor.u32 %s104, %s105
      %p107 = scmp.eq.s32.totalorder %s106, 0
      %s109 = sadd.s32 %s108, 1
      %s110 = scalar_select %p107, %s108, %s109
      %p113 = pneg %p107
      %p114 = scmp.eq.s32.totalorder %s14, 1
      %p115 = por %p113, %p114
      %p116 = scmp.ne.s32.totalorder %s108, %s111
      %p117 = scmp.eq.s32.totalorder %s14, 0
      %p118 = por %p116, %p117
      %p119 = scmp.ne.s32.totalorder %s108, %s111
      %p120 = scmp.eq.s32.totalorder %s19, 1
      %p121 = por %p119, %p120
      %p122 = scmp.ne.s32.totalorder %s111, %s112
      %p123 = scmp.eq.s32.totalorder %s19, 0
      %p124 = por %p122, %p123
      %p125 = scmp.ne.s32.totalorder %s111, %s112
      %p126 = scmp.eq.s32.totalorder %s20, 1
      %p127 = por %p125, %p126
      %p129 = scmp.ne.s32.totalorder %s112, %s128
      %p130 = scmp.eq.s32.totalorder %s20, 0
      %p131 = por %p129, %p130
      %s132 = ssub.s32 %s21, %s33
      %s133 = ssub.s32 %s22, %s29
      %s134 = sor.u32 %s132, %s133
      %p135 = scmp.eq.s32.totalorder %s134, 0
      %s137 = sadd.s32 %s136, 1
      %s138 = scalar_select %p135, %s136, %s137
      %p141 = pneg %p135
      %p142 = scmp.eq.s32.totalorder %s14, 1
      %p143 = por %p141, %p142
      %p144 = scmp.ne.s32.totalorder %s136, %s139
      %p145 = scmp.eq.s32.totalorder %s14, 0
      %p146 = por %p144, %p145
      %p147 = scmp.ne.s32.totalorder %s136, %s139
      %p148 = scmp.eq.s32.totalorder %s19, 1
      %p149 = por %p147, %p148
      %p150 = scmp.ne.s32.totalorder %s139, %s140
      %p151 = scmp.eq.s32.totalorder %s19, 0
      %p152 = por %p150, %p151
      %p153 = scmp.ne.s32.totalorder %s139, %s140
      %p154 = scmp.eq.s32.totalorder %s20, 1
      %p155 = por %p153, %p154
      %p157 = scmp.ne.s32.totalorder %s140, %s156
      %p158 = scmp.eq.s32.totalorder %s20, 0
      %p159 = por %p157, %p158
      %p160 = scmp.le.s32.totalorder 1, %s14
      %p161 = scmp.lt.s32.totalorder %s14, 3
      %p162 = pnand %p160, %p161
      %p163 = pneg %p162
      // Predicated region
      $region9: #{tpu_custom_call.1} parent=5 // pred_check
        _
      $region10: #{tpu_custom_call.1} parent=5 // pred_check_branch
        %165 = sbr.rel (%p162) target = $region12
      $region11: #{tpu_custom_call.1} parent=5 // pred_region
        %s166 = ssub.s32 %s14, 1
        // Predicated region
        $region13: #{tpu_custom_call.1} parent=11 // pred_check
          %p167 = pneg %p75
        $region14: #{tpu_custom_call.1} parent=11 // pred_check_branch
          %169 = sbr.rel (%p167) target = $region16
        $region15: #{tpu_custom_call.1} parent=11 // pred_region
          _
        $region16: #{tpu_custom_call.1} parent=11 // pred_fallthru
          _
        // Predicated region
        $region17: #{tpu_custom_call.1} parent=11 // pred_check
          %p170 = pneg %p96
        $region18: #{tpu_custom_call.1} parent=11 // pred_check_branch
          %172 = sbr.rel (%p170) target = $region20
        $region19: #{tpu_custom_call.1} parent=11 // pred_region
          _
        $region20: #{tpu_custom_call.1} parent=11 // pred_fallthru
          _
      $region12: #{tpu_custom_call.1} parent=5 // pred_fallthru
        _
      %p173 = scmp.lt.s32.totalorder %s14, 2
      // Predicated region
      $region21: #{tpu_custom_call.1} parent=5 // pred_check
        %p174 = pneg %p173
      $region22: #{tpu_custom_call.1} parent=5 // pred_check_branch
        %176 = sbr.rel (%p174) target = $region24
      $region23: #{tpu_custom_call.1} parent=5 // pred_region
        // Predicated region
        $region25: #{tpu_custom_call.1} parent=23 // pred_check
          %p177 = pneg %p48
        $region26: #{tpu_custom_call.1} parent=23 // pred_check_branch
          %179 = sbr.rel (%p177) target = $region28
        $region27: #{tpu_custom_call.1} parent=23 // pred_region
          %s180 = smul.u32 2, %s22
          %p181 = scmp.lt.s32.totalorder %s21, 1
          %s182 = scalar_select %p181, %s21, 1
          %p183 = scmp.lt.s32.totalorder %s180, 1
          %s184 = scalar_select %p183, %s180, 1
          %s185 = smul.addr %s182, 2
          %s186 = sadd.s32 %s184, %s185
          %s187 = smul.addr %s186, 4
          %s188 = scalar_lea.vmem %s0, %s187
          %s189 = smul.u32 2, %s22
        $region28: #{tpu_custom_call.1} parent=23 // pred_fallthru
          _
      $region24: #{tpu_custom_call.1} parent=5 // pred_fallthru
        _
      %p190 = scmp.le.s32.totalorder 1, %s14
      %p191 = scmp.lt.s32.totalorder %s14, 3
      %p192 = pnand %p190, %p191
      %p193 = pneg %p192
      // Predicated region
      $region29: #{tpu_custom_call.1} parent=5 // pred_check
        _
      $region30: #{tpu_custom_call.1} parent=5 // pred_check_branch
        %195 = sbr.rel (%p192) target = $region32
      $region31: #{tpu_custom_call.1} parent=5 // pred_region
        %s196 = ssub.s32 %s14, 1
        %s197 = smul.u32 2, %s24
        %p198 = scmp.lt.s32.totalorder %s23, 1
        %s199 = scalar_select %p198, %s23, 1
        %p200 = scmp.lt.s32.totalorder %s197, 1
        %s201 = scalar_select %p200, %s197, 1
        %s202 = smul.addr %s199, 2
        %s203 = sadd.s32 %s201, %s202
        %s204 = smul.addr %s203, 4
        %s205 = scalar_lea.vmem %s0, %s204
        %p206 = pneg %p54
        %p207 = pneg %p51
        %p208 = pneg %p75
        %p209 = pneg %p72
        %p210 = pneg %p96
        %p211 = pneg %p93
        %p212 = pneg %p124
        %p213 = pneg %p121
        %s214 = sand.u32 %s111, 1
        %s215 = scalar_lea.sflag [#allocation3], %s214
        %s216 = sand.u32 %s111, 1
        %s217 = smul.addr %s216, 2
        %s218 = scalar_lea.vmem [#allocation2], %s217
        %p219 = pneg %p152
        %p220 = pneg %p149
        %s221 = smul.u32 2, %s24
        %p222 = scmp.lt.s32.totalorder %s23, 1
        %s223 = scalar_select %p222, %s23, 1
        %p224 = scmp.lt.s32.totalorder %s221, 1
        %s225 = scalar_select %p224, %s221, 1
        %s226 = smul.addr %s223, 2
        %s227 = sadd.s32 %s225, %s226
        %s228 = smul.addr %s227, 8
        %s229 = scalar_lea.vmem %s4, %s228
        %s230 = smul.u32 2, %s24
        %p231 = scmp.lt.s32.totalorder %s23, 1
        %s232 = scalar_select %p231, %s23, 1
        %p233 = scmp.lt.s32.totalorder %s230, 1
        %s234 = scalar_select %p233, %s230, 1
        %s235 = smul.addr %s232, 2
        %s236 = sadd.s32 %s234, %s235
        %s237 = smul.addr %s236, 4
        %s238 = scalar_lea.vmem %s0, %s237
        %s239 = smul.u32 2, %s24
        %s240 = smul.u32 2, %s24
        %s241 = smul.u32 2, %s24
        %p242 = scmp.lt.s32.totalorder %s23, 1
        %s243 = scalar_select %p242, %s23, 1
        %p244 = scmp.lt.s32.totalorder %s241, 1
        %s245 = scalar_select %p244, %s241, 1
        %s246 = smul.addr %s243, 2
        %s247 = sadd.s32 %s245, %s246
        %s248 = smul.addr %s247, 8
        %s249 = scalar_lea.vmem %s4, %s248
        %s250 = smul.u32 2, %s24
        %v251 = vld [vmem:[%s238] sm:$0xff]
        %v252 = vld [vmem:[%s1] sm:$0x7f]
        %v253 = vld [vmem:[%s2] sm:$0x7f]
        %255 = vset.pattern.permute.xlu0 0
        %256 = vperm.xlu0 %255, %v252
        %v257 = vpop.permute.xlu0 %256
        %v260 = vperm.slane %v251, 0
        %v261 = vperm.slane %v251, 4
        %v264 = vmul.f32 %v257, %v260
        %v265 = vmul.f32 %v257, %v261
        %v266 = vperm.slane %v260, 0
        %v267 = vperm.slane %v261, 0
        %v268 = vmul.f32 %v257, %v266
        %v269 = vmul.f32 %v257, %v267
        %270 = vset.pattern.permute.xlu0 1
        %271 = vperm.xlu0 %270, %v252
        %v272 = vpop.permute.xlu0 %271
        %v274 = vperm.slane %v251, 1
        %v275 = vperm.slane %v251, 5
        %v278 = vmul.f32 %v272, %v274
        %v279 = vmul.f32 %v272, %v275
        %v280 = vadd.f32 %v264, %v278
        %v281 = vadd.f32 %v265, %v279
        %v282 = vperm.slane %v274, 1
        %v283 = vperm.slane %v275, 1
        %v284 = vmul.f32 %v272, %v282
        %v285 = vmul.f32 %v272, %v283
        %v286 = vadd.f32 %v268, %v284
        %v287 = vadd.f32 %v269, %v285
        %288 = vset.pattern.permute.xlu0 2
        %289 = vperm.xlu0 %288, %v252
        %v290 = vpop.permute.xlu0 %289
        %v292 = vperm.slane %v251, 2
        %v293 = vperm.slane %v251, 6
        %v296 = vmul.f32 %v290, %v292
        %v297 = vmul.f32 %v290, %v293
        %v298 = vadd.f32 %v280, %v296
        %v299 = vadd.f32 %v281, %v297
        %v300 = vperm.slane %v292, 2
        %v301 = vperm.slane %v293, 2
        %v302 = vmul.f32 %v290, %v300
        %v303 = vmul.f32 %v290, %v301
        %v304 = vadd.f32 %v286, %v302
        %v305 = vadd.f32 %v287, %v303
        %306 = vset.pattern.permute.xlu0 3
        %307 = vperm.xlu0 %306, %v252
        %v308 = vpop.permute.xlu0 %307
        %v310 = vperm.slane %v251, 3
        %v311 = vperm.slane %v251, 7
        %v314 = vmul.f32 %v308, %v310
        %v315 = vmul.f32 %v308, %v311
        %v316 = vadd.f32 %v298, %v314
        %v317 = vadd.f32 %v299, %v315
        %v318 = vperm.slane %v310, 3
        %v319 = vperm.slane %v311, 3
        %v320 = vmul.f32 %v308, %v318
        %v321 = vmul.f32 %v308, %v319
        %v322 = vadd.f32 %v304, %v320
        %v323 = vadd.f32 %v305, %v321
        %325 = vset.pattern.permute.xlu0 0
        %326 = vperm.xlu0 %325, %v253
        %v327 = vpop.permute.xlu0 %326
        %v329 = vadd.f32 %v316, %v327
        %v330 = vadd.f32 %v317, %v327
        %v331 = vxor.u32 %v329, 2147483648
        %v332 = vxor.u32 %v330, 2147483648
        %v333 = vmul.f32 %v331, 1.442695
        %v334 = vpow.pop %v333
        %v335 = vmul.f32 %v332, 1.442695
        %v336 = vpow.pop %v335
        %v337 = vadd.f32 %v334, 1.0
        %v338 = vadd.f32 %v336, 1.0
        %v339 = vrcp.pop %v337
        %v340 = vmul.f32 %v337, %v339
        %v341 = vsub.f32 1.0, %v340
        %v342 = vmul.f32 %v339, %v341
        %v343 = vadd.f32 %v339, %v342
        %vm344 = vweird.f32 %v337
        %vm345 = vweird.f32 %v339
        %vm346 = vmor %vm344, %vm345
        %v347 = vsel %vm346, %v339, %v343
        %v348 = vand.u32 2147483647, %v337
        %vm349 = vcmp.eq.f32.partialorder %v348, 8.507059e+37
        %v350 = vand.u32 %v337, 2147483648
        %v351 = vor.u32 1.1754944e-38, %v350
        %v352 = vsel %vm349, %v351, %v347
        %v353 = vmul.f32 1.0, %v352
        %v354 = vrcp.pop %v338
        %v355 = vmul.f32 %v338, %v354
        %v356 = vsub.f32 1.0, %v355
        %v357 = vmul.f32 %v354, %v356
        %v358 = vadd.f32 %v354, %v357
        %vm359 = vweird.f32 %v338
        %vm360 = vweird.f32 %v354
        %vm361 = vmor %vm359, %vm360
        %v362 = vsel %vm361, %v354, %v358
        %v363 = vand.u32 2147483647, %v338
        %vm364 = vcmp.eq.f32.partialorder %v363, 8.507059e+37
        %v365 = vand.u32 %v338, 2147483648
        %v366 = vor.u32 1.1754944e-38, %v365
        %v367 = vsel %vm364, %v366, %v362
        %v368 = vmul.f32 1.0, %v367
        %v371 = vrot.slane %v368, 7
        %vm372 = vcmask 1040384
        %v373 = vsel %vm372, %v353, %v371
        %v375 = vlaneseq
        %vm376 = vcmp.ge.s32.totalorder %v375, 0
        %vm377 = vcmp.lt.s32.totalorder %v375, 256
        %vm378 = vmand %vm376, %vm377
        %379 = vst.msk [vmem:[%s218] sm:$0x3] %vm378, %v373
        %v380 = vadd.f32 %v322, %v327
        %v381 = vadd.f32 %v323, %v327
        %v382 = vxor.u32 %v380, 2147483648
        %v383 = vxor.u32 %v381, 2147483648
        %v384 = vmul.f32 %v382, 1.442695
        %v385 = vpow.pop %v384
        %v386 = vmul.f32 %v383, 1.442695
        %v387 = vpow.pop %v386
        %v388 = vadd.f32 %v385, 1.0
        %v389 = vadd.f32 %v387, 1.0
        %v390 = vrcp.pop %v388
        %v391 = vmul.f32 %v388, %v390
        %v392 = vsub.f32 1.0, %v391
        %v393 = vmul.f32 %v390, %v392
        %v394 = vadd.f32 %v390, %v393
        %vm395 = vweird.f32 %v388
        %vm396 = vweird.f32 %v390
        %vm397 = vmor %vm395, %vm396
        %v398 = vsel %vm397, %v390, %v394
        %v399 = vand.u32 2147483647, %v388
        %vm400 = vcmp.eq.f32.partialorder %v399, 8.507059e+37
        %v401 = vand.u32 %v388, 2147483648
        %v402 = vor.u32 1.1754944e-38, %v401
        %v403 = vsel %vm400, %v402, %v398
        %v404 = vmul.f32 1.0, %v403
        %v405 = vrcp.pop %v389
        %v406 = vmul.f32 %v389, %v405
        %v407 = vsub.f32 1.0, %v406
        %v408 = vmul.f32 %v405, %v407
        %v409 = vadd.f32 %v405, %v408
        %vm410 = vweird.f32 %v389
        %vm411 = vweird.f32 %v405
        %vm412 = vmor %vm410, %vm411
        %v413 = vsel %vm412, %v405, %v409
        %v414 = vand.u32 2147483647, %v389
        %vm415 = vcmp.eq.f32.partialorder %v414, 8.507059e+37
        %v416 = vand.u32 %v389, 2147483648
        %v417 = vor.u32 1.1754944e-38, %v416
        %v418 = vsel %vm415, %v417, %v413
        %v419 = vmul.f32 1.0, %v418
        %v422 = vrot.slane %v404, 1
        %v423 = vrot.slane %v419, 1
        %426 = vst [vmem:[%s249] sm:$0x3f] %v422
        %427 = vst [vmem:[%s249 + $0x8] sm:$0x3f] %v423
        %s428 = sand.u32 %s111, 1
        %s429 = scalar_lea.sflag [#allocation3], %s428
        %s430 = sand.u32 %s111, 1
        %s431 = smul.addr %s430, 2
        %s432 = scalar_lea.vmem [#allocation2], %s431
        %s433 = smul.u32 2, %s24
        %p434 = scmp.lt.s32.totalorder %s23, 1
        %s435 = scalar_select %p434, %s23, 1
        %p436 = scmp.lt.s32.totalorder %s433, 1
        %s437 = scalar_select %p436, %s433, 1
        %s438 = smul.addr %s435, 2
        %s439 = sadd.s32 %s437, %s438
        %s440 = smul.addr %s439, 8
        %s441 = scalar_lea.vmem %s4, %s440
        // Predicated region
        $region33: #{tpu_custom_call.1} parent=31 // pred_check
          %p442 = pneg %p121
        $region34: #{tpu_custom_call.1} parent=31 // pred_check_branch
          %444 = sbr.rel (%p442) target = $region36
        $region35: #{tpu_custom_call.1} parent=31 // pred_region
          %s445 = smul.u32 2, %s24
          %447 = vsyncadd %s429, 0
          %s448 = smul.addr %s23, 2
          %s449 = sadd.s32 %s445, %s448
          %s450 = scalar_lea.hbm %s3, %s449
          %s452 = sshll.u32 %s432, 4
          %s453 = int_to_ptr.vmem [resolvable:$true] %s452
          %s454 = sshll.u32 %s450, 4
          %s455 = int_to_ptr.hbm [resolvable:$true] %s454
          %457 = dma.vmem_to_hbm [thread:$0]  %s453, 32, %s455, %s429
        $region36: #{tpu_custom_call.1} parent=31 // pred_fallthru
          _
        // Predicated region
        $region37: #{tpu_custom_call.1} parent=31 // pred_check
          %p458 = pneg %p149
        $region38: #{tpu_custom_call.1} parent=31 // pred_check_branch
          %460 = sbr.rel (%p458) target = $region40
        $region39: #{tpu_custom_call.1} parent=31 // pred_region
          %s461 = smul.u32 2, %s24
        $region40: #{tpu_custom_call.1} parent=31 // pred_fallthru
          _
      $region32: #{tpu_custom_call.1} parent=5 // pred_fallthru
        _
      %p462 = scmp.le.s32.totalorder 2, %s14
      // Predicated region
      $region41: #{tpu_custom_call.1} parent=5 // pred_check
        %p463 = pneg %p462
      $region42: #{tpu_custom_call.1} parent=5 // pred_check_branch
        %465 = sbr.rel (%p463) target = $region44
      $region43: #{tpu_custom_call.1} parent=5 // pred_region
        %s466 = ssub.s32 %s14, 2
        // Predicated region
        $region45: #{tpu_custom_call.1} parent=43 // pred_check
          %p467 = pneg %p127
        $region46: #{tpu_custom_call.1} parent=43 // pred_check_branch
          %469 = sbr.rel (%p467) target = $region48
        $region47: #{tpu_custom_call.1} parent=43 // pred_region
          %s470 = sand.u32 %s112, 1
          %s471 = scalar_lea.sflag [#allocation3], %s470
          %s472 = sand.u32 %s112, 1
          %s473 = smul.addr %s472, 2
          %s474 = scalar_lea.vmem [#allocation2], %s473
          %476 = dma.done %s471, 32
        $region48: #{tpu_custom_call.1} parent=43 // pred_fallthru
          _
        // Predicated region
        $region49: #{tpu_custom_call.1} parent=43 // pred_check
          %p477 = pneg %p155
        $region50: #{tpu_custom_call.1} parent=43 // pred_check_branch
          %479 = sbr.rel (%p477) target = $region52
        $region51: #{tpu_custom_call.1} parent=43 // pred_region
          %s480 = smul.u32 2, %s26
          %p481 = scmp.lt.s32.totalorder %s25, 1
          %s482 = scalar_select %p481, %s25, 1
          %p483 = scmp.lt.s32.totalorder %s480, 1
          %s484 = scalar_select %p483, %s480, 1
          %s485 = smul.addr %s482, 2
          %s486 = sadd.s32 %s484, %s485
          %s487 = smul.addr %s486, 8
          %s488 = scalar_lea.vmem %s4, %s487
        $region52: #{tpu_custom_call.1} parent=43 // pred_fallthru
          _
      $region44: #{tpu_custom_call.1} parent=5 // pred_fallthru
        _
    $region6: #{tpu_custom_call.1} parent=1 // loop_footer
      %s18 = sadd.s32 1, %s14
    $region7: #{tpu_custom_call.1} parent=1 // loop_footer_branch
      %13 = sbr.rel target = $region3
    $region8: #{tpu_custom_call.1} parent=1 // loop_exit
      _
    %489 = vsyncpa [#allocation3], 1
    %s490 = scalar_lea.sflag [#allocation3], 1
    %491 = vsyncpa %s490, 1

</llo_original>
